<compile_context>
chip_gen: v6e
topology: v6e:2x2x1
jax: 0.10.0
libtpu: 0.0.40
codegen_flags: <defaults>
</compile_context>

<pallas_src>
import functools

import jax
import jax.numpy as jnp
from jax.experimental import pallas as pl
from jax.experimental.pallas import tpu as pltpu


def _round_up(x, m):
    return ((x + m - 1) // m) * m


def mlp_kernel(x_ref, wgu_ref, wd_ref, o_ref, acc_ref, *, ti):
    """One (row-tile, intermediate-tile) grid step of the fused SwiGLU MLP.

    Grid axis 0: row tiles (parallel -> megacore shards this on v7x).
    Grid axis 1: intermediate-dim tiles (reduction / 'arbitrary'), accumulated
                 into the f32 acc scratch and flushed on the last step.
    """
    j = pl.program_id(1)

    @pl.when(j == 0)
    def _():
        acc_ref[...] = jnp.zeros_like(acc_ref)

    x = x_ref[...]
    # Fused gate+up projection: a single MXU pass of width 2*ti.
    gu = jnp.dot(x, wgu_ref[...], preferred_element_type=jnp.float32)
    g = gu[:, :ti]
    u = gu[:, ti:]
    # SiLU(g) * u in f32 (sigmoid goes to the EUP).
    h = (g * jax.nn.sigmoid(g)) * u
    # Partial down projection, accumulated over intermediate tiles.
    acc_ref[...] += jnp.dot(h.astype(wd_ref.dtype), wd_ref[...],
                            preferred_element_type=jnp.float32)

    @pl.when(j == pl.num_programs(1) - 1)
    def _():
        o_ref[...] = acc_ref[...].astype(o_ref.dtype)


def mlp_pallas(x, w_gate, w_up, w_down, *, tm=256, ti=256,
               compute_dtype=jnp.bfloat16):
    """x: [..., H] -> [..., H]; w_gate/w_up: [H, I]; w_down: [I, H]."""
    orig_shape = x.shape
    H = x.shape[-1]
    I = w_gate.shape[1]
    assert w_up.shape == (H, I) and w_down.shape == (I, H)
    assert I % 128 == 0, "intermediate size must be a multiple of 128"

    x2 = x.reshape(-1, H)
    M = x2.shape[0]

    # Row tile: as large as requested, but never larger than the (padded)
    # number of rows.  Pad M with zero rows so any batch*seq works.
    if M < tm:
        tm = _round_up(M, 8)
    M_pad = _round_up(M, tm)
    if M_pad != M:
        x2 = jnp.pad(x2, ((0, M_pad - M), (0, 0)))

    # Intermediate tile: largest of (512, 256, 128) that divides I and is <= ti.
    chosen_ti = 128
    for cand in (512, 256, 128):
        if cand <= ti and I % cand == 0:
            chosen_ti = cand
            break
    ti = chosen_ti
    n_i = I // ti

    # bf16 inputs / weights (MXU-native, halves HBM + VMEM), f32 accumulation.
    xc = x2.astype(compute_dtype)
    # Interleave gate/up by intermediate tile so one (H, 2*ti) block holds
    # [gate_tile_j | up_tile_j]: a single fused matmul per grid step.
    w_gu = jnp.concatenate(
        [w_gate.astype(compute_dtype).reshape(H, n_i, ti),
         w_up.astype(compute_dtype).reshape(H, n_i, ti)],
        axis=2,
    ).reshape(H, 2 * I)
    w_dn = w_down.astype(compute_dtype)

    kernel = functools.partial(mlp_kernel, ti=ti)

    out = pl.pallas_call(
        kernel,
        out_shape=jax.ShapeDtypeStruct((M_pad, H), x.dtype),
        grid_spec=pltpu.PrefetchScalarGridSpec(
            num_scalar_prefetch=0,
            grid=(M_pad // tm, n_i),
            in_specs=[
                pl.BlockSpec((tm, H), lambda i, j: (i, 0)),      # x row tile (resident over j)
                pl.BlockSpec((H, 2 * ti), lambda i, j: (0, j)),  # fused [gate|up] col tile
                pl.BlockSpec((ti, H), lambda i, j: (j, 0)),      # down-proj row tile
            ],
            out_specs=pl.BlockSpec((tm, H), lambda i, j: (i, 0)),
            scratch_shapes=[pltpu.VMEM((tm, H), jnp.float32)],
        ),
        compiler_params=pltpu.CompilerParams(
            dimension_semantics=("parallel", "arbitrary"),
            vmem_limit_bytes=64 * 1024 * 1024),
    )(xc, w_gu, w_dn)

    if M_pad != M:
        out = out[:M]
    return out.reshape(orig_shape)


def mlp_reference(x, w_gate, w_up, w_down):
    g = jnp.dot(x, w_gate)
    u = jnp.dot(x, w_up)
    h = (g * jax.nn.sigmoid(g)) * u
    return jnp.dot(h, w_down)


if __name__ == "__main__":
    # Small config consistent with the module: hidden_size=128, intermediate_size=256.
    batch, seq, hidden, intermediate = 2, 8, 128, 256

    key = jax.random.PRNGKey(0)
    kx, kg, ku, kd = jax.random.split(key, 4)

    x = jax.random.normal(kx, (batch, seq, hidden), dtype=jnp.float32)
    # Deterministic "Linear" weights (stored pre-transposed: [in, out]).
    scale_h = 1.0 / jnp.sqrt(hidden)
    scale_i = 1.0 / jnp.sqrt(intermediate)
    w_gate = jax.random.uniform(kg, (hidden, intermediate), jnp.float32,
                                -scale_h, scale_h)
    w_up = jax.random.uniform(ku, (hidden, intermediate), jnp.float32,
                              -scale_h, scale_h)
    w_down = jax.random.uniform(kd, (intermediate, hidden), jnp.float32,
                                -scale_i, scale_i)

    out = mlp_pallas(x, w_gate, w_up, w_down)
    jax.block_until_ready(out)

    ref = mlp_reference(x, w_gate, w_up, w_down)
    assert out.shape == x.shape
    # bf16 matmul inputs with f32 accumulation -> loose tolerance vs f32 ref.
    assert jnp.allclose(out, ref, atol=3e-2, rtol=3e-2), "mismatch vs reference"

    print("KERNEL_OK")
</pallas_src>

<mosaic_0001>
module attributes {stable_mosaic.version = 11 : i64} {
  func.func @mlp_kernel(%arg0: i32, %arg1: i32, %arg2: memref<16x128xbf16, #tpu.memory_space<vmem>>, %arg3: memref<128x512xbf16, #tpu.memory_space<vmem>>, %arg4: memref<256x128xbf16, #tpu.memory_space<vmem>>, %arg5: memref<16x128xf32, #tpu.memory_space<vmem>>, %arg6: memref<16x128xf32, #tpu.memory_space<vmem>>) attributes {dimension_semantics = [#tpu.dimension_semantics<parallel>, #tpu.dimension_semantics<arbitrary>], iteration_bounds = array<i64: 1, 1>, scalar_prefetch = 0 : i64, scratch_operands = 1 : i64, tpu.core_type = #tpu.core_type<tc>, window_params = [{transform_indices = @transform_0, window_bounds = array<i64: 16, 128>}, {transform_indices = @transform_1, window_bounds = array<i64: 128, 512>}, {transform_indices = @transform_2, window_bounds = array<i64: 256, 128>}, {transform_indices = @transform_3, window_bounds = array<i64: 16, 128>}]} {
    %c0_i32 = arith.constant 0 : i32
    %0 = arith.cmpi eq, %arg1, %c0_i32 : i32
    %1 = arith.extui %0 : i1 to i32
    %c0_i32_0 = arith.constant 0 : i32
    %2 = arith.cmpi ne, %1, %c0_i32_0 : i32
    scf.if %2 {
      %cst_14 = arith.constant 0.000000e+00 : f32
      %24 = vector.broadcast %cst_14 : f32 to vector<16x128xf32>
      %c0_15 = arith.constant 0 : index
      %c0_16 = arith.constant 0 : index
      %25 = vector.load %arg6[%c0_15, %c0_16] : memref<16x128xf32, #tpu.memory_space<vmem>>, vector<16x128xf32>
      tpu.vector_store %arg6[%c0_15, %c0_16], %24 {strides = array<i32>} : memref<16x128xf32, #tpu.memory_space<vmem>>, vector<16x128xf32>,
    } else {
    }
    %c0 = arith.constant 0 : index
    %c0_1 = arith.constant 0 : index
    %3 = vector.load %arg2[%c0, %c0_1] : memref<16x128xbf16, #tpu.memory_space<vmem>>, vector<16x128xbf16>
    %c0_2 = arith.constant 0 : index
    %c0_3 = arith.constant 0 : index
    %4 = vector.load %arg3[%c0_2, %c0_3] : memref<128x512xbf16, #tpu.memory_space<vmem>>, vector<128x512xbf16>
    %cst = arith.constant dense<0.000000e+00> : vector<16x512xf32>
    %5 = tpu.matmul %3, %4, %cst {dimension_numbers = #tpu.dot_dimension_numbers<[1], [0], [0], [1], [0, 0, 1, 1], [], []>} : vector<16x128xbf16>, vector<128x512xbf16>, vector<16x512xf32> -> vector<16x512xf32>
    %6 = vector.extract_strided_slice %5 {offsets = [0, 0], sizes = [16, 256], strides = [1, 1]} : vector<16x512xf32> to vector<16x256xf32>
    %7 = vector.extract_strided_slice %5 {offsets = [0, 256], sizes = [16, 256], strides = [1, 1]} : vector<16x512xf32> to vector<16x256xf32>
    %8 = arith.negf %6 : vector<16x256xf32>
    %9 = math.exp %8 : vector<16x256xf32>
    %cst_4 = arith.constant 1.000000e+00 : f32
    %10 = vector.broadcast %cst_4 : f32 to vector<16x256xf32>
    %11 = arith.addf %10, %9 : vector<16x256xf32>
    %12 = arith.divf %10, %11 : vector<16x256xf32>
    %13 = arith.mulf %6, %12 : vector<16x256xf32>
    %14 = arith.mulf %13, %7 : vector<16x256xf32>
    %c0_5 = arith.constant 0 : index
    %c0_6 = arith.constant 0 : index
    %15 = vector.load %arg6[%c0_5, %c0_6] : memref<16x128xf32, #tpu.memory_space<vmem>>, vector<16x128xf32>
    %16 = arith.truncf %14 : vector<16x256xf32> to vector<16x256xbf16>
    %c0_7 = arith.constant 0 : index
    %c0_8 = arith.constant 0 : index
    %17 = vector.load %arg4[%c0_7, %c0_8] : memref<256x128xbf16, #tpu.memory_space<vmem>>, vector<256x128xbf16>
    %cst_9 = arith.constant dense<0.000000e+00> : vector<16x128xf32>
    %18 = tpu.matmul %16, %17, %cst_9 {dimension_numbers = #tpu.dot_dimension_numbers<[1], [0], [0], [1], [0, 0, 1, 1], [], []>} : vector<16x256xbf16>, vector<256x128xbf16>, vector<16x128xf32> -> vector<16x128xf32>
    %19 = arith.addf %15, %18 : vector<16x128xf32>
    %c0_10 = arith.constant 0 : index
    %c0_11 = arith.constant 0 : index
    %20 = vector.load %arg6[%c0_10, %c0_11] : memref<16x128xf32, #tpu.memory_space<vmem>>, vector<16x128xf32>
    tpu.vector_store %arg6[%c0_10, %c0_11], %19 {strides = array<i32>} : memref<16x128xf32, #tpu.memory_space<vmem>>, vector<16x128xf32>,
    %c0_i32_12 = arith.constant 0 : i32
    %21 = arith.cmpi eq, %arg1, %c0_i32_12 : i32
    %22 = arith.extui %21 : i1 to i32
    %c0_i32_13 = arith.constant 0 : i32
    %23 = arith.cmpi ne, %22, %c0_i32_13 : i32
    scf.if %23 {
      %c0_14 = arith.constant 0 : index
      %c0_15 = arith.constant 0 : index
      %24 = vector.load %arg6[%c0_14, %c0_15] : memref<16x128xf32, #tpu.memory_space<vmem>>, vector<16x128xf32>
      %c0_16 = arith.constant 0 : index
      %c0_17 = arith.constant 0 : index
      %25 = vector.load %arg5[%c0_16, %c0_17] : memref<16x128xf32, #tpu.memory_space<vmem>>, vector<16x128xf32>
      tpu.vector_store %arg5[%c0_16, %c0_17], %24 {strides = array<i32>} : memref<16x128xf32, #tpu.memory_space<vmem>>, vector<16x128xf32>,
    } else {
    }
    return
  }
  func.func @transform_0(%arg0: i32, %arg1: i32) -> (i32, i32) {
    %c0_i32 = arith.constant 0 : i32
    %c0_i32_0 = arith.constant 0 : i32
    return %arg0, %c0_i32 : i32, i32
  }
  func.func @transform_1(%arg0: i32, %arg1: i32) -> (i32, i32) {
    %c0_i32 = arith.constant 0 : i32
    %c0_i32_0 = arith.constant 0 : i32
    return %c0_i32, %arg1 : i32, i32
  }
  func.func @transform_2(%arg0: i32, %arg1: i32) -> (i32, i32) {
    %c0_i32 = arith.constant 0 : i32
    %c0_i32_0 = arith.constant 0 : i32
    return %arg1, %c0_i32 : i32, i32
  }
  func.func @transform_3(%arg0: i32, %arg1: i32) -> (i32, i32) {
    %c0_i32 = arith.constant 0 : i32
    %c0_i32_0 = arith.constant 0 : i32
    return %arg0, %c0_i32 : i32, i32
  }
}

</mosaic_0001>

<llo_original>
// kernel: tpu_custom_call.1
$region0: #{tpu_custom_call.1}
  #allocation0 [shape = 'u32[]', space=smem, size = 0x4, offset = 0x4, fixed_abs, tag = 'smem constant byte address 0x4 - core index']
  #allocation1 [shape = 'u32[144,128]{1,0:T(1,128)}', space=vmem, size = 0x12000, scoped, tag = 'internal scratch']
  #allocation2 [shape = 'f32[16,128]{1,0:T(8,128)}', space=vmem, size = 0x2000, scoped, tag = 'scratch operand']
  %s0 = inlined_call_operand.hbm [shape: bf16[16,128], index: 0, kind: input, shape index: {}]
  %s1 = inlined_call_operand.hbm [shape: bf16[128,512], index: 1, kind: input, shape index: {}]
  %s2 = inlined_call_operand.hbm [shape: bf16[256,128], index: 2, kind: input, shape index: {}]
  %s3 = inlined_call_operand.hbm [shape: f32[16,128], index: 3, kind: output, shape index: {}]
  %s4 = sld [smem:[#allocation0]]
  $region42: #{tpu_custom_call.1} parent=0
    _
  %s6 = ssub.s32 1, %s4
  %s7 = scalar_select 0, %s6, %s4
  $region1: #{tpu_custom_call.1} parent=0
    #allocation3 [shape = 'u8[4096]{0}', space=vmem, size = 0x1000, scoped, tag = 'input window, operand 0, single buffered']
    #allocation4 [shape = 's32[1]{0}', space=sflag, size = 0x4, scoped, tag = 'scoped memory for tpu_custom_call.1']
    #allocation5 [shape = 's32[1]{0}', space=sflag, size = 0x4, scoped, tag = 'scoped memory for tpu_custom_call.1']
    #allocation6 [shape = 'u8[131072]{0}', space=vmem, size = 0x20000, scoped, tag = 'input window, operand 1, single buffered']
    #allocation7 [shape = 's32[1]{0}', space=sflag, size = 0x4, scoped, tag = 'scoped memory for tpu_custom_call.1']
    #allocation8 [shape = 'u8[65536]{0}', space=vmem, size = 0x10000, scoped, tag = 'input window, operand 2, single buffered']
    #allocation9 [shape = 'u8[8192]{0}', space=vmem, size = 0x2000, scoped, tag = 'output window, operand 0, single buffered']
    %8 = vsyncpa [#allocation4], 0
    %9 = vsyncpa [#allocation7], 0
    %10 = vsyncpa [#allocation5], 0
    // Predicated region
    $region2: #{tpu_custom_call.1} parent=1 // pred_check
      _
    $region3: #{tpu_custom_call.1} parent=1 // pred_check_branch
      %12 = sbr.rel (0) target = $region5
    $region4: #{tpu_custom_call.1} parent=1 // pred_region
      %s14 = ssub.s32 128, 128
      %15 = vsyncadd [#allocation4], %s14
      %s16 = sshll.u32 [#allocation3], 4
      %s17 = int_to_ptr.vmem [resolvable:$true] %s16
      %22 = dma.hbm_to_vmem [thread:$0]  %s0, 128, %s17, [#allocation4], 64, 64, 4
    $region5: #{tpu_custom_call.1} parent=1 // pred_fallthru
      _
    // Predicated region
    $region6: #{tpu_custom_call.1} parent=1 // pred_check
      _
    $region7: #{tpu_custom_call.1} parent=1 // pred_check_branch
      %24 = sbr.rel (0) target = $region9
    $region8: #{tpu_custom_call.1} parent=1 // pred_region
      %s26 = ssub.s32 4096, 4096
      %27 = vsyncadd [#allocation7], %s26
      %s28 = sshll.u32 [#allocation6], 4
      %s29 = int_to_ptr.vmem [resolvable:$true] %s28
      %34 = dma.hbm_to_vmem [thread:$0]  %s1, 4096, %s29, [#allocation7], 256, 256, 16
    $region9: #{tpu_custom_call.1} parent=1 // pred_fallthru
      _
    // Predicated region
    $region10: #{tpu_custom_call.1} parent=1 // pred_check
      _
    $region11: #{tpu_custom_call.1} parent=1 // pred_check_branch
      %36 = sbr.rel (0) target = $region13
    $region12: #{tpu_custom_call.1} parent=1 // pred_region
      %s38 = ssub.s32 2048, 2048
      %39 = vsyncadd [#allocation7], %s38
      %s40 = sshll.u32 [#allocation8], 4
      %s41 = int_to_ptr.vmem [resolvable:$true] %s40
      %46 = dma.hbm_to_vmem [thread:$0]  %s2, 2048, %s41, [#allocation7], 64, 64, 4
    $region13: #{tpu_custom_call.1} parent=1 // pred_fallthru
      _
    // Predicated region
    $region14: #{tpu_custom_call.1} parent=1 // pred_check
      _
    $region15: #{tpu_custom_call.1} parent=1 // pred_check_branch
      %48 = sbr.rel (0) target = $region17
    $region16: #{tpu_custom_call.1} parent=1 // pred_region
      %49 = dma.done [#allocation4], 128
    $region17: #{tpu_custom_call.1} parent=1 // pred_fallthru
      _
    // Predicated region
    $region18: #{tpu_custom_call.1} parent=1 // pred_check
      _
    $region19: #{tpu_custom_call.1} parent=1 // pred_check_branch
      %51 = sbr.rel (0) target = $region21
    $region20: #{tpu_custom_call.1} parent=1 // pred_region
      %52 = dma.done [#allocation7], 4096
    $region21: #{tpu_custom_call.1} parent=1 // pred_fallthru
      _
    // Predicated region
    $region22: #{tpu_custom_call.1} parent=1 // pred_check
      _
    $region23: #{tpu_custom_call.1} parent=1 // pred_check_branch
      %54 = sbr.rel (0) target = $region25
    $region24: #{tpu_custom_call.1} parent=1 // pred_region
      %55 = dma.done [#allocation7], 2048
    $region25: #{tpu_custom_call.1} parent=1 // pred_fallthru
      _
    %p57 = scmp.eq.s32.totalorder 0, 0
    // Predicated region
    $region26: #{tpu_custom_call.1} parent=1 // pred_check
      %p58 = pneg %p57
    $region27: #{tpu_custom_call.1} parent=1 // pred_check_branch
      %60 = sbr.rel (%p58) target = $region29
    $region28: #{tpu_custom_call.1} parent=1 // pred_region
      %61 = vst [vmem:[#allocation2] sm:$0xff] 0.0
      %62 = vst [vmem:[#allocation2 + $0x8] sm:$0xff] 0.0
    $region29: #{tpu_custom_call.1} parent=1 // pred_fallthru
      _
    %v63 = vld [vmem:[#allocation3] sm:$0xf]
    %v64 = vld [vmem:[#allocation3 + $0x4] sm:$0xf]
    %v65 = vld [vmem:[#allocation6] sm:$0xff]
    %v66 = vld [vmem:[#allocation6 + $0x8] sm:$0xff]
    %v67 = vld [vmem:[#allocation6 + $0x10] sm:$0xff]
    %v68 = vld [vmem:[#allocation6 + $0x18] sm:$0xff]
    %v69 = vld [vmem:[#allocation6 + $0x20] sm:$0xff]
    %v70 = vld [vmem:[#allocation6 + $0x28] sm:$0xff]
    %v71 = vld [vmem:[#allocation6 + $0x30] sm:$0xff]
    %v72 = vld [vmem:[#allocation6 + $0x38] sm:$0xff]
    %v73 = vld [vmem:[#allocation6 + $0x40] sm:$0xff]
    %v74 = vld [vmem:[#allocation6 + $0x48] sm:$0xff]
    %v75 = vld [vmem:[#allocation6 + $0x50] sm:$0xff]
    %v76 = vld [vmem:[#allocation6 + $0x58] sm:$0xff]
    %v77 = vld [vmem:[#allocation6 + $0x60] sm:$0xff]
    %v78 = vld [vmem:[#allocation6 + $0x68] sm:$0xff]
    %v79 = vld [vmem:[#allocation6 + $0x70] sm:$0xff]
    %v80 = vld [vmem:[#allocation6 + $0x78] sm:$0xff]
    %v81 = vld [vmem:[#allocation6 + $0x80] sm:$0xff]
    %v82 = vld [vmem:[#allocation6 + $0x88] sm:$0xff]
    %v83 = vld [vmem:[#allocation6 + $0x90] sm:$0xff]
    %v84 = vld [vmem:[#allocation6 + $0x98] sm:$0xff]
    %v85 = vld [vmem:[#allocation6 + $0xa0] sm:$0xff]
    %v86 = vld [vmem:[#allocation6 + $0xa8] sm:$0xff]
    %v87 = vld [vmem:[#allocation6 + $0xb0] sm:$0xff]
    %v88 = vld [vmem:[#allocation6 + $0xb8] sm:$0xff]
    %v89 = vld [vmem:[#allocation6 + $0xc0] sm:$0xff]
    %v90 = vld [vmem:[#allocation6 + $0xc8] sm:$0xff]
    %v91 = vld [vmem:[#allocation6 + $0xd0] sm:$0xff]
    %v92 = vld [vmem:[#allocation6 + $0xd8] sm:$0xff]
    %v93 = vld [vmem:[#allocation6 + $0xe0] sm:$0xff]
    %v94 = vld [vmem:[#allocation6 + $0xe8] sm:$0xff]
    %v95 = vld [vmem:[#allocation6 + $0xf0] sm:$0xff]
    %v96 = vld [vmem:[#allocation6 + $0xf8] sm:$0xff]
    %v99 = vunpack.c.l.b16 %v63
    %v100 = vunpack.c.l.b16 %v64
    %v101 = vpack.c.b16 %v100, %v99
    %v135 = vunpack.c.l.b16 %v65
    %v136 = vunpack.c.h.b16 %v65
    %v137 = vunpack.c.l.b16 %v66
    %v138 = vunpack.c.h.b16 %v66
    %v139 = vunpack.c.l.b16 %v67
    %v140 = vunpack.c.h.b16 %v67
    %v141 = vunpack.c.l.b16 %v68
    %v142 = vunpack.c.h.b16 %v68
    %v143 = vunpack.c.l.b16 %v69
    %v144 = vunpack.c.h.b16 %v69
    %v145 = vunpack.c.l.b16 %v70
    %v146 = vunpack.c.h.b16 %v70
    %v147 = vunpack.c.l.b16 %v71
    %v148 = vunpack.c.h.b16 %v71
    %v149 = vunpack.c.l.b16 %v72
    %v150 = vunpack.c.h.b16 %v72
    %v151 = vunpack.c.l.b16 %v73
    %v152 = vunpack.c.h.b16 %v73
    %v153 = vunpack.c.l.b16 %v74
    %v154 = vunpack.c.h.b16 %v74
    %v155 = vunpack.c.l.b16 %v75
    %v156 = vunpack.c.h.b16 %v75
    %v157 = vunpack.c.l.b16 %v76
    %v158 = vunpack.c.h.b16 %v76
    %v159 = vunpack.c.l.b16 %v77
    %v160 = vunpack.c.h.b16 %v77
    %v161 = vunpack.c.l.b16 %v78
    %v162 = vunpack.c.h.b16 %v78
    %v163 = vunpack.c.l.b16 %v79
    %v164 = vunpack.c.h.b16 %v79
    %v165 = vunpack.c.l.b16 %v80
    %v166 = vunpack.c.h.b16 %v80
    %v167 = vunpack.c.l.b16 %v81
    %v168 = vunpack.c.h.b16 %v81
    %v169 = vunpack.c.l.b16 %v82
    %v170 = vunpack.c.h.b16 %v82
    %v171 = vunpack.c.l.b16 %v83
    %v172 = vunpack.c.h.b16 %v83
    %v173 = vunpack.c.l.b16 %v84
    %v174 = vunpack.c.h.b16 %v84
    %v175 = vunpack.c.l.b16 %v85
    %v176 = vunpack.c.h.b16 %v85
    %v177 = vunpack.c.l.b16 %v86
    %v178 = vunpack.c.h.b16 %v86
    %v179 = vunpack.c.l.b16 %v87
    %v180 = vunpack.c.h.b16 %v87
    %v181 = vunpack.c.l.b16 %v88
    %v182 = vunpack.c.h.b16 %v88
    %v183 = vunpack.c.l.b16 %v89
    %v184 = vunpack.c.h.b16 %v89
    %v185 = vunpack.c.l.b16 %v90
    %v186 = vunpack.c.h.b16 %v90
    %v187 = vunpack.c.l.b16 %v91
    %v188 = vunpack.c.h.b16 %v91
    %v189 = vunpack.c.l.b16 %v92
    %v190 = vunpack.c.h.b16 %v92
    %v191 = vunpack.c.l.b16 %v93
    %v192 = vunpack.c.h.b16 %v93
    %v193 = vunpack.c.l.b16 %v94
    %v194 = vunpack.c.h.b16 %v94
    %v195 = vunpack.c.l.b16 %v95
    %v196 = vunpack.c.h.b16 %v95
    %v197 = vunpack.c.l.b16 %v96
    %v198 = vunpack.c.h.b16 %v96
    %v199 = vpack.c.b16 %v139, %v135
    %v200 = vpack.c.b16 %v140, %v136
    %v201 = vpack.c.b16 %v141, %v137
    %v202 = vpack.c.b16 %v142, %v138
    %v203 = vpack.c.b16 %v147, %v143
    %v204 = vpack.c.b16 %v148, %v144
    %v205 = vpack.c.b16 %v149, %v145
    %v206 = vpack.c.b16 %v150, %v146
    %v207 = vpack.c.b16 %v155, %v151
    %v208 = vpack.c.b16 %v156, %v152
    %v209 = vpack.c.b16 %v157, %v153
    %v210 = vpack.c.b16 %v158, %v154
    %v211 = vpack.c.b16 %v163, %v159
    %v212 = vpack.c.b16 %v164, %v160
    %v213 = vpack.c.b16 %v165, %v161
    %v214 = vpack.c.b16 %v166, %v162
    %v215 = vpack.c.b16 %v171, %v167
    %v216 = vpack.c.b16 %v172, %v168
    %v217 = vpack.c.b16 %v173, %v169
    %v218 = vpack.c.b16 %v174, %v170
    %v219 = vpack.c.b16 %v179, %v175
    %v220 = vpack.c.b16 %v180, %v176
    %v221 = vpack.c.b16 %v181, %v177
    %v222 = vpack.c.b16 %v182, %v178
    %v223 = vpack.c.b16 %v187, %v183
    %v224 = vpack.c.b16 %v188, %v184
    %v225 = vpack.c.b16 %v189, %v185
    %v226 = vpack.c.b16 %v190, %v186
    %v227 = vpack.c.b16 %v195, %v191
    %v228 = vpack.c.b16 %v196, %v192
    %v229 = vpack.c.b16 %v197, %v193
    %v230 = vpack.c.b16 %v198, %v194
    %263 = vmatprep.subr.bf16.mxu0 %v228
    %264 = vmatpush1.bf16.msra.mxu0 %v227
    %265 = vmatprep.subr.bf16.mxu0 %v224
    %266 = vmatpush1.bf16.msra.mxu0 %v223
    %267 = vmatprep.subr.bf16.mxu0 %v220
    %268 = vmatpush1.bf16.msra.mxu0 %v219
    %269 = vmatprep.subr.bf16.mxu0 %v216
    %270 = vmatpush1.bf16.msra.mxu0 %v215
    %271 = vmatprep.subr.bf16.mxu0 %v212
    %272 = vmatpush1.bf16.msra.mxu0 %v211
    %273 = vmatprep.subr.bf16.mxu0 %v208
    %274 = vmatpush1.bf16.msra.mxu0 %v207
    %275 = vmatprep.subr.bf16.mxu0 %v204
    %276 = vmatpush1.bf16.msra.mxu0 %v203
    %277 = vmatprep.subr.bf16.mxu0 %v200
    %278 = vmatpush1.bf16.msra.mxu0 %v199
    %279 = vmatprep.subr.bf16.mxu0 0
    %280 = vmatpush2.bf16.msra.mxu0 0
    %281 = vmatprep.subr.bf16.mxu0 0
    %282 = vmatpush2.bf16.msra.mxu0 0
    %283 = vmatprep.subr.bf16.mxu0 0
    %284 = vmatpush2.bf16.msra.mxu0 0
    %285 = vmatprep.subr.bf16.mxu0 0
    %286 = vmatpush2.bf16.msra.mxu0 0
    %287 = vmatprep.subr.bf16.mxu0 0
    %288 = vmatpush2.bf16.msra.mxu0 0
    %289 = vmatprep.subr.bf16.mxu0 0
    %290 = vmatpush2.bf16.msra.mxu0 0
    %291 = vmatprep.subr.bf16.mxu0 0
    %292 = vmatpush2.bf16.msra.mxu0 0
    %293 = vmatprep.subr.bf16.mxu0 0
    %294 = vmatpush2.bf16.msra.mxu0 0
    %295 = vmatprep.mubr.bf16.mxu0 0
    %296 = vmatmul.mubr.bf16.gmra.mxu0 %v101
    %v297 = vpop.f32.mrf.mxu0
    %v298 = vadd.f32 0.0, %v297
    %v299 = vpop.f32.mrf.mxu0
    %v300 = vadd.f32 0.0, %v299
    %v301 = vpop.f32.mrf.mxu0
    %v302 = vadd.f32 0.0, %v301
    %v303 = vpop.f32.mrf.mxu0
    %v304 = vadd.f32 0.0, %v303
    %305 = vdwg.mxu0
    %306 = vmatprep.subr.bf16.mxu0 %v230
    %307 = vmatpush1.bf16.msra.mxu0 %v229
    %308 = vmatprep.subr.bf16.mxu0 %v226
    %309 = vmatpush1.bf16.msra.mxu0 %v225
    %310 = vmatprep.subr.bf16.mxu0 %v222
    %311 = vmatpush1.bf16.msra.mxu0 %v221
    %312 = vmatprep.subr.bf16.mxu0 %v218
    %313 = vmatpush1.bf16.msra.mxu0 %v217
    %314 = vmatprep.subr.bf16.mxu0 %v214
    %315 = vmatpush1.bf16.msra.mxu0 %v213
    %316 = vmatprep.subr.bf16.mxu0 %v210
    %317 = vmatpush1.bf16.msra.mxu0 %v209
    %318 = vmatprep.subr.bf16.mxu0 %v206
    %319 = vmatpush1.bf16.msra.mxu0 %v205
    %320 = vmatprep.subr.bf16.mxu0 %v202
    %321 = vmatpush1.bf16.msra.mxu0 %v201
    %322 = vmatprep.subr.bf16.mxu0 0
    %323 = vmatpush2.bf16.msra.mxu0 0
    %324 = vmatprep.subr.bf16.mxu0 0
    %325 = vmatpush2.bf16.msra.mxu0 0
    %326 = vmatprep.subr.bf16.mxu0 0
    %327 = vmatpush2.bf16.msra.mxu0 0
    %328 = vmatprep.subr.bf16.mxu0 0
    %329 = vmatpush2.bf16.msra.mxu0 0
    %330 = vmatprep.subr.bf16.mxu0 0
    %331 = vmatpush2.bf16.msra.mxu0 0
    %332 = vmatprep.subr.bf16.mxu0 0
    %333 = vmatpush2.bf16.msra.mxu0 0
    %334 = vmatprep.subr.bf16.mxu0 0
    %335 = vmatpush2.bf16.msra.mxu0 0
    %336 = vmatprep.subr.bf16.mxu0 0
    %337 = vmatpush2.bf16.msra.mxu0 0
    %338 = vmatprep.mubr.bf16.mxu0 0
    %339 = vmatmul.mubr.bf16.gmra.mxu0 %v101
    %v340 = vpop.f32.mrf.mxu0
    %v341 = vadd.f32 0.0, %v340
    %v342 = vpop.f32.mrf.mxu0
    %v343 = vadd.f32 0.0, %v342
    %v344 = vpop.f32.mrf.mxu0
    %v345 = vadd.f32 0.0, %v344
    %v346 = vpop.f32.mrf.mxu0
    %v347 = vadd.f32 0.0, %v346
    %348 = vdwg.mxu0
    %v349 = vxor.u32 %v298, 2147483648
    %v350 = vxor.u32 %v300, 2147483648
    %v351 = vxor.u32 %v302, 2147483648
    %v352 = vxor.u32 %v304, 2147483648
    %v353 = vmul.f32 %v349, 1.442695
    %v354 = vpow.pop %v353
    %v355 = vmul.f32 %v350, 1.442695
    %v356 = vpow.pop %v355
    %v357 = vmul.f32 %v351, 1.442695
    %v358 = vpow.pop %v357
    %v359 = vmul.f32 %v352, 1.442695
    %v360 = vpow.pop %v359
    %v361 = vadd.f32 %v354, 1.0
    %v362 = vadd.f32 %v356, 1.0
    %v363 = vadd.f32 %v358, 1.0
    %v364 = vadd.f32 %v360, 1.0
    %v365 = vrcp.pop %v361
    %v366 = vmul.f32 1.0, %v365
    %v367 = vrcp.pop %v362
    %v368 = vmul.f32 1.0, %v367
    %v369 = vrcp.pop %v363
    %v370 = vmul.f32 1.0, %v369
    %v371 = vrcp.pop %v364
    %v372 = vmul.f32 1.0, %v371
    %v373 = vmul.f32 %v298, %v366
    %v374 = vmul.f32 %v300, %v368
    %v375 = vmul.f32 %v302, %v370
    %v376 = vmul.f32 %v304, %v372
    %v377 = vmul.f32 %v373, %v341
    %v378 = vmul.f32 %v374, %v343
    %v379 = vmul.f32 %v375, %v345
    %v380 = vmul.f32 %v376, %v347
    %v381 = vld [vmem:[#allocation2] sm:$0xff]
    %v382 = vld [vmem:[#allocation2 + $0x8] sm:$0xff]
    %v383 = vpack.c.bf16 %v379, %v377
    %v384 = vpack.c.bf16 %v380, %v378
    %v385 = vld [vmem:[#allocation8] sm:$0xf]
    %v386 = vld [vmem:[#allocation8 + $0x4] sm:$0xf]
    %v387 = vld [vmem:[#allocation8 + $0x8] sm:$0xf]
    %v388 = vld [vmem:[#allocation8 + $0xc] sm:$0xf]
    %v389 = vld [vmem:[#allocation8 + $0x10] sm:$0xf]
    %v390 = vld [vmem:[#allocation8 + $0x14] sm:$0xf]
    %v391 = vld [vmem:[#allocation8 + $0x18] sm:$0xf]
    %v392 = vld [vmem:[#allocation8 + $0x1c] sm:$0xf]
    %v393 = vld [vmem:[#allocation8 + $0x20] sm:$0xf]
    %v394 = vld [vmem:[#allocation8 + $0x24] sm:$0xf]
    %v395 = vld [vmem:[#allocation8 + $0x28] sm:$0xf]
    %v396 = vld [vmem:[#allocation8 + $0x2c] sm:$0xf]
    %v397 = vld [vmem:[#allocation8 + $0x30] sm:$0xf]
    %v398 = vld [vmem:[#allocation8 + $0x34] sm:$0xf]
    %v399 = vld [vmem:[#allocation8 + $0x38] sm:$0xf]
    %v400 = vld [vmem:[#allocation8 + $0x3c] sm:$0xf]
    %v401 = vld [vmem:[#allocation8 + $0x40] sm:$0xf]
    %v402 = vld [vmem:[#allocation8 + $0x44] sm:$0xf]
    %v403 = vld [vmem:[#allocation8 + $0x48] sm:$0xf]
    %v404 = vld [vmem:[#allocation8 + $0x4c] sm:$0xf]
    %v405 = vld [vmem:[#allocation8 + $0x50] sm:$0xf]
    %v406 = vld [vmem:[#allocation8 + $0x54] sm:$0xf]
    %v407 = vld [vmem:[#allocation8 + $0x58] sm:$0xf]
    %v408 = vld [vmem:[#allocation8 + $0x5c] sm:$0xf]
    %v409 = vld [vmem:[#allocation8 + $0x60] sm:$0xf]
    %v410 = vld [vmem:[#allocation8 + $0x64] sm:$0xf]
    %v411 = vld [vmem:[#allocation8 + $0x68] sm:$0xf]
    %v412 = vld [vmem:[#allocation8 + $0x6c] sm:$0xf]
    %v413 = vld [vmem:[#allocation8 + $0x70] sm:$0xf]
    %v414 = vld [vmem:[#allocation8 + $0x74] sm:$0xf]
    %v415 = vld [vmem:[#allocation8 + $0x78] sm:$0xf]
    %v416 = vld [vmem:[#allocation8 + $0x7c] sm:$0xf]
    %v449 = vunpack.c.l.b16 %v385
    %v450 = vunpack.c.l.b16 %v386
    %v451 = vunpack.c.l.b16 %v387
    %v452 = vunpack.c.l.b16 %v388
    %v453 = vunpack.c.l.b16 %v389
    %v454 = vunpack.c.l.b16 %v390
    %v455 = vunpack.c.l.b16 %v391
    %v456 = vunpack.c.l.b16 %v392
    %v457 = vunpack.c.l.b16 %v393
    %v458 = vunpack.c.l.b16 %v394
    %v459 = vunpack.c.l.b16 %v395
    %v460 = vunpack.c.l.b16 %v396
    %v461 = vunpack.c.l.b16 %v397
    %v462 = vunpack.c.l.b16 %v398
    %v463 = vunpack.c.l.b16 %v399
    %v464 = vunpack.c.l.b16 %v400
    %v465 = vunpack.c.l.b16 %v401
    %v466 = vunpack.c.l.b16 %v402
    %v467 = vunpack.c.l.b16 %v403
    %v468 = vunpack.c.l.b16 %v404
    %v469 = vunpack.c.l.b16 %v405
    %v470 = vunpack.c.l.b16 %v406
    %v471 = vunpack.c.l.b16 %v407
    %v472 = vunpack.c.l.b16 %v408
    %v473 = vunpack.c.l.b16 %v409
    %v474 = vunpack.c.l.b16 %v410
    %v475 = vunpack.c.l.b16 %v411
    %v476 = vunpack.c.l.b16 %v412
    %v477 = vunpack.c.l.b16 %v413
    %v478 = vunpack.c.l.b16 %v414
    %v479 = vunpack.c.l.b16 %v415
    %v480 = vunpack.c.l.b16 %v416
    %v481 = vpack.c.b16 %v450, %v449
    %v482 = vpack.c.b16 %v452, %v451
    %v483 = vpack.c.b16 %v454, %v453
    %v484 = vpack.c.b16 %v456, %v455
    %v485 = vpack.c.b16 %v458, %v457
    %v486 = vpack.c.b16 %v460, %v459
    %v487 = vpack.c.b16 %v462, %v461
    %v488 = vpack.c.b16 %v464, %v463
    %v489 = vpack.c.b16 %v466, %v465
    %v490 = vpack.c.b16 %v468, %v467
    %v491 = vpack.c.b16 %v470, %v469
    %v492 = vpack.c.b16 %v472, %v471
    %v493 = vpack.c.b16 %v474, %v473
    %v494 = vpack.c.b16 %v476, %v475
    %v495 = vpack.c.b16 %v478, %v477
    %v496 = vpack.c.b16 %v480, %v479
    %513 = vmatprep.subr.bf16.mxu0 0
    %514 = vmatpush1.bf16.msra.mxu0 %v488
    %515 = vmatprep.subr.bf16.mxu0 0
    %516 = vmatpush1.bf16.msra.mxu0 %v487
    %517 = vmatprep.subr.bf16.mxu0 0
    %518 = vmatpush1.bf16.msra.mxu0 %v486
    %519 = vmatprep.subr.bf16.mxu0 0
    %520 = vmatpush1.bf16.msra.mxu0 %v485
    %521 = vmatprep.subr.bf16.mxu0 0
    %522 = vmatpush1.bf16.msra.mxu0 %v484
    %523 = vmatprep.subr.bf16.mxu0 0
    %524 = vmatpush1.bf16.msra.mxu0 %v483
    %525 = vmatprep.subr.bf16.mxu0 0
    %526 = vmatpush1.bf16.msra.mxu0 %v482
    %527 = vmatprep.subr.bf16.mxu0 0
    %528 = vmatpush1.bf16.msra.mxu0 %v481
    %529 = vmatprep.subr.bf16.mxu0 0
    %530 = vmatpush2.bf16.msra.mxu0 %v496
    %531 = vmatprep.subr.bf16.mxu0 0
    %532 = vmatpush2.bf16.msra.mxu0 %v495
    %533 = vmatprep.subr.bf16.mxu0 0
    %534 = vmatpush2.bf16.msra.mxu0 %v494
    %535 = vmatprep.subr.bf16.mxu0 0
    %536 = vmatpush2.bf16.msra.mxu0 %v493
    %537 = vmatprep.subr.bf16.mxu0 0
    %538 = vmatpush2.bf16.msra.mxu0 %v492
    %539 = vmatprep.subr.bf16.mxu0 0
    %540 = vmatpush2.bf16.msra.mxu0 %v491
    %541 = vmatprep.subr.bf16.mxu0 0
    %542 = vmatpush2.bf16.msra.mxu0 %v490
    %543 = vmatprep.subr.bf16.mxu0 0
    %544 = vmatpush2.bf16.msra.mxu0 %v489
    %545 = vmatprep.mubr.bf16.mxu0 %v384
    %546 = vmatmul.mubr.bf16.gmra.mxu0 %v383
    %v547 = vpop.f32.mrf.mxu0
    %v548 = vadd.f32 0.0, %v547
    %v549 = vpop.f32.mrf.mxu0
    %v550 = vpop.f32.mrf.mxu0
    %v551 = vadd.f32 0.0, %v550
    %v552 = vpop.f32.mrf.mxu0
    %553 = vdwg.mxu0
    %v554 = vadd.f32 %v381, %v548
    %v555 = vadd.f32 %v382, %v551
    %556 = vst [vmem:[#allocation2] sm:$0xff] %v554
    %557 = vst [vmem:[#allocation2 + $0x8] sm:$0xff] %v555
    // Predicated region
    $region30: #{tpu_custom_call.1} parent=1 // pred_check
      %p558 = pneg %p57
    $region31: #{tpu_custom_call.1} parent=1 // pred_check_branch
      %560 = sbr.rel (%p558) target = $region33
    $region32: #{tpu_custom_call.1} parent=1 // pred_region
      %v561 = vld [vmem:[#allocation2] sm:$0xff]
      %v562 = vld [vmem:[#allocation2 + $0x8] sm:$0xff]
      %563 = vst [vmem:[#allocation9] sm:$0xff] %v561
      %564 = vst [vmem:[#allocation9 + $0x8] sm:$0xff] %v562
    $region33: #{tpu_custom_call.1} parent=1 // pred_fallthru
      _
    // Predicated region
    $region34: #{tpu_custom_call.1} parent=1 // pred_check
      _
    $region35: #{tpu_custom_call.1} parent=1 // pred_check_branch
      %566 = sbr.rel (0) target = $region37
    $region36: #{tpu_custom_call.1} parent=1 // pred_region
      %s568 = ssub.s32 256, 256
      %569 = vsyncadd [#allocation5], %s568
      %s570 = sshll.u32 [#allocation9], 4
      %s571 = int_to_ptr.vmem [resolvable:$true] %s570
      %576 = dma.vmem_to_hbm [thread:$0]  %s571, 256, %s3, [#allocation5], 128, 128, 8
    $region37: #{tpu_custom_call.1} parent=1 // pred_fallthru
      _
    // Predicated region
    $region38: #{tpu_custom_call.1} parent=1 // pred_check
      _
    $region39: #{tpu_custom_call.1} parent=1 // pred_check_branch
      %578 = sbr.rel (0) target = $region41
    $region40: #{tpu_custom_call.1} parent=1 // pred_region
      %579 = dma.done [#allocation5], 256
    $region41: #{tpu_custom_call.1} parent=1 // pred_fallthru
      _
    %580 = vsyncpa [#allocation4], 1
    %581 = vsyncpa [#allocation7], 1
    %582 = vsyncpa [#allocation5], 1

</llo_original>
